<compile_context>
chip_gen: v7x
topology: tpu7x:2x2x1
jax: 0.10.0
libtpu: 0.0.40
codegen_flags: <defaults>
</compile_context>

<pallas_src>
import math

import jax
import jax.numpy as jnp
from jax.experimental import pallas as pl
from jax.experimental.pallas import tpu as pltpu


def _fixed_embedding_table(c_in, d_model):
    """Same construction as FixedEmbedding / PositionalEmbedding in PyTorch."""
    pos = jnp.arange(c_in, dtype=jnp.float32)[:, None]
    div = jnp.exp(
        jnp.arange(0, d_model, 2, dtype=jnp.float32) * (-(math.log(10000.0) / d_model))
    )
    w = jnp.zeros((c_in, d_model), dtype=jnp.float32)
    w = w.at[:, 0::2].set(jnp.sin(pos * div))
    w = w.at[:, 1::2].set(jnp.cos(pos * div))
    return w


def _round_up(x, m):
    return ((x + m - 1) // m) * m


def data_embedding_kernel(xcat_ref, mark_ref, w_ref, tbl_ref, o_ref):
    # xcat_ref: (TM, 3*c_in) f32   [x_prev | x | x_next] along channels
    # mark_ref: (TM, 3)      i32   indices already offset into the combined table
    # w_ref:    (3*c_in, d_pad) f32 fused circular-conv weight (taps stacked on K)
    # tbl_ref:  (K_pad, d_pad)  f32 combined [year; month; day] table, zero-padded
    # o_ref:    (TM, d_pad)     f32
    x_cat = xcat_ref[...]                                   # (TM, 3*c_in)

    # Single fused conv matmul: y[t] = x[(t-1)%L]@W0 + x[t]@W1 + x[(t+1)%L]@W2.
    val = jnp.dot(x_cat, w_ref[...], preferred_element_type=jnp.float32)

    # Single fused lookup for year + month + day: the three index ranges are
    # disjoint after the wrapper's offsets, so OR-ing the three compares gives
    # a multi-hot row whose matmul equals the sum of the three embeddings.
    mark = mark_ref[...]                                    # (TM, 3) int32
    tm = mark.shape[0]
    k_pad = tbl_ref.shape[0]
    iota = jax.lax.broadcasted_iota(jnp.int32, (tm, k_pad), 1)
    onehot = (
        (iota == mark[:, 0:1]) | (iota == mark[:, 1:2]) | (iota == mark[:, 2:3])
    ).astype(jnp.float32)                                   # (TM, K_pad)
    temporal = jnp.dot(onehot, tbl_ref[...], preferred_element_type=jnp.float32)

    # TODO(synk): nn.Dropout(p=0.1) is identity in eval/inference mode, so it is omitted.
    o_ref[...] = (val + temporal).astype(o_ref.dtype)


def data_embedding_wo_pos(x, x_mark, conv_w, year_tbl, month_tbl, day_tbl):
    """x: (B, L, c_in) f32, x_mark: (B, L, 3) int, conv_w: (3, c_in, d_model)."""
    B, L, c_in = x.shape
    d_model = conv_w.shape[2]
    d_pad = _round_up(d_model, 128)                  # lane-dense output stores

    # --- Fuse the 3 circular-conv taps into one matmul operand. -------------
    x_prev = jnp.roll(x, 1, axis=1)                  # x[(t-1) mod L]
    x_next = jnp.roll(x, -1, axis=1)                 # x[(t+1) mod L]
    x_cat = jnp.concatenate([x_prev, x, x_next], axis=-1).reshape(B * L, 3 * c_in)

    w_flat = conv_w.reshape(3 * c_in, d_model)       # rows: [tap0 chans, tap1, tap2]
    if d_pad != d_model:
        w_flat = jnp.pad(w_flat, ((0, 0), (0, d_pad - d_model)))

    # --- Fuse the 3 fixed-embedding lookups into one multi-hot matmul. ------
    n_year, n_month = year_tbl.shape[0], month_tbl.shape[0]
    tbl = jnp.concatenate([year_tbl, month_tbl, day_tbl], axis=0)  # (165, d_model)
    k_tot = tbl.shape[0]
    k_pad = _round_up(k_tot, 128)                    # 165 -> 256
    tbl = jnp.pad(tbl, ((0, k_pad - k_tot), (0, d_pad - d_model)))

    offs = jnp.array([0, n_year, n_year + n_month], dtype=jnp.int32)
    mark = (x_mark.astype(jnp.int32) + offs).reshape(B * L, 3)

    # --- Row tile: largest TM that fits a conservative VMEM budget. ---------
    N = B * L

    def est_bytes(tm):
        return (
            2 * tm * 3 * c_in * 4            # x_cat tile, double-buffered
            + 2 * tm * 128 * 4               # mark tile (lane-padded)
            + 2 * tm * d_pad * 4             # output tile, double-buffered
            + 2 * 3 * c_in * d_pad * 4       # fused conv weight (resident)
            + 2 * k_pad * d_pad * 4          # combined table (resident)
            + tm * k_pad * 4                 # one-hot intermediate
            + 2 * tm * d_pad * 4             # val / temporal intermediates
        )

    budget = 20 * 1024 * 1024
    tm = 8
    for cand in (4096, 2048, 1024, 512, 256, 128, 64, 32, 16, 8):
        if est_bytes(cand) <= budget:
            tm = cand
            break
    tm = min(tm, _round_up(N, 8))                    # don't over-pad tiny inputs
    n_pad = _round_up(N, tm)
    if n_pad != N:
        # Padding rows: zero x_cat -> zero conv output; mark 0 is a valid table
        # row -> no OOB; padded rows are sliced off below.
        x_cat = jnp.pad(x_cat, ((0, n_pad - N), (0, 0)))
        mark = jnp.pad(mark, ((0, n_pad - N), (0, 0)))

    grid = (n_pad // tm,)
    vmem_limit = int(min(max(2 * est_bytes(tm), 8 << 20), 48 << 20))

    out = pl.pallas_call(
        data_embedding_kernel,
        out_shape=jax.ShapeDtypeStruct((n_pad, d_pad), jnp.float32),
        grid_spec=pltpu.PrefetchScalarGridSpec(
            num_scalar_prefetch=0,
            grid=grid,
            in_specs=[
                pl.BlockSpec((tm, 3 * c_in), lambda i: (i, 0)),
                pl.BlockSpec((tm, 3), lambda i: (i, 0)),
                pl.BlockSpec((3 * c_in, d_pad), lambda i: (0, 0)),
                pl.BlockSpec((k_pad, d_pad), lambda i: (0, 0)),
            ],
            out_specs=pl.BlockSpec((tm, d_pad), lambda i: (i, 0)),
        ),
        compiler_params=pltpu.CompilerParams(
            dimension_semantics=("parallel",),
            vmem_limit_bytes=vmem_limit,
        ),
    )(x_cat, mark, w_flat, tbl)

    out = out[:N, :d_model].reshape(B, L, d_model)
    return out


def reference(x, x_mark, conv_w, year_tbl, month_tbl, day_tbl):
    """Plain-JAX reference of DataEmbedding_wo_pos forward (eval mode)."""
    x_prev = jnp.roll(x, 1, axis=1)
    x_next = jnp.roll(x, -1, axis=1)
    val = (
        jnp.einsum("blc,cd->bld", x_prev, conv_w[0])
        + jnp.einsum("blc,cd->bld", x, conv_w[1])
        + jnp.einsum("blc,cd->bld", x_next, conv_w[2])
    )
    temporal = (
        year_tbl[x_mark[..., 0]]
        + month_tbl[x_mark[..., 1]]
        + day_tbl[x_mark[..., 2]]
    )
    return val + temporal


if __name__ == "__main__":
    B, L, c_in, d_model = 2, 24, 4, 32

    key = jax.random.PRNGKey(0)
    k1, k2, k3, k4, k5 = jax.random.split(key, 5)

    x = jax.random.normal(k1, (B, L, c_in), dtype=jnp.float32)
    year = jax.random.randint(k2, (B, L, 1), 0, 120)
    month = jax.random.randint(k3, (B, L, 1), 0, 13)
    day = jax.random.randint(k4, (B, L, 1), 0, 32)
    x_mark = jnp.concatenate([year, month, day], axis=-1).astype(jnp.int32)

    # Conv1d weight: PyTorch shape (d_model, c_in, 3), kaiming_normal_
    # (fan_in = c_in * kernel_size, leaky_relu gain with default slope 0.01).
    fan_in = c_in * 3
    gain = math.sqrt(2.0 / (1.0 + 0.01 ** 2))
    std = gain / math.sqrt(fan_in)
    w_torch = jax.random.normal(k5, (d_model, c_in, 3), dtype=jnp.float32) * std
    conv_w = jnp.transpose(w_torch, (2, 1, 0))  # (3, c_in, d_model), tap k first

    # Fixed (non-trainable) temporal embedding tables: year=120, month=13, day=32.
    year_tbl = _fixed_embedding_table(120, d_model)
    month_tbl = _fixed_embedding_table(13, d_model)
    day_tbl = _fixed_embedding_table(32, d_model)

    out = data_embedding_wo_pos(x, x_mark, conv_w, year_tbl, month_tbl, day_tbl)
    out = jax.block_until_ready(out)

    ref = reference(x, x_mark, conv_w, year_tbl, month_tbl, day_tbl)
    assert out.shape == (B, L, d_model)
    assert jnp.allclose(out, ref, rtol=1e-5, atol=1e-5), "mismatch vs JAX reference"

    print("KERNEL_OK")
</pallas_src>

<mosaic_0001>
module attributes {stable_mosaic.version = 11 : i64} {
  func.func @data_embedding_kernel(%arg0: i32, %arg1: memref<48x12xf32, #tpu.memory_space<vmem>>, %arg2: memref<48x3xi32, #tpu.memory_space<vmem>>, %arg3: memref<12x128xf32, #tpu.memory_space<vmem>>, %arg4: memref<256x128xf32, #tpu.memory_space<vmem>>, %arg5: memref<48x128xf32, #tpu.memory_space<vmem>>) attributes {dimension_semantics = [#tpu.dimension_semantics<parallel>], iteration_bounds = array<i64: 1>, scalar_prefetch = 0 : i64, scratch_operands = 0 : i64, tpu.core_type = #tpu.core_type<tc>, window_params = [{transform_indices = @transform_0, window_bounds = array<i64: 48, 12>}, {transform_indices = @transform_1, window_bounds = array<i64: 48, 3>}, {pipeline_mode = #tpu.pipeline_mode<synchronous>, transform_indices = @transform_2, window_bounds = array<i64: 12, 128>}, {pipeline_mode = #tpu.pipeline_mode<synchronous>, transform_indices = @transform_3, window_bounds = array<i64: 256, 128>}, {transform_indices = @transform_4, window_bounds = array<i64: 48, 128>}]} {
    %c0 = arith.constant 0 : index
    %c0_0 = arith.constant 0 : index
    %0 = vector.load %arg1[%c0, %c0_0] : memref<48x12xf32, #tpu.memory_space<vmem>>, vector<48x12xf32>
    %c0_1 = arith.constant 0 : index
    %c0_2 = arith.constant 0 : index
    %1 = vector.load %arg3[%c0_1, %c0_2] : memref<12x128xf32, #tpu.memory_space<vmem>>, vector<12x128xf32>
    %cst = arith.constant dense<0.000000e+00> : vector<48x128xf32>
    %2 = tpu.matmul %0, %1, %cst {dimension_numbers = #tpu.dot_dimension_numbers<[1], [0], [0], [1], [0, 0, 1, 1], [], []>} : vector<48x12xf32>, vector<12x128xf32>, vector<48x128xf32> -> vector<48x128xf32>
    %c0_3 = arith.constant 0 : index
    %c0_4 = arith.constant 0 : index
    %3 = vector.load %arg2[%c0_3, %c0_4] : memref<48x3xi32, #tpu.memory_space<vmem>>, vector<48x3xi32>
    %4 = tpu.iota {dimensions = array<i32: 1>} : vector<48x256xi32>
    %5 = vector.extract_strided_slice %3 {offsets = [0, 0], sizes = [48, 1], strides = [1, 1]} : vector<48x3xi32> to vector<48x1xi32>
    %6 = vector.broadcast %5 : vector<48x1xi32> to vector<48x256xi32>
    %7 = arith.cmpi eq, %4, %6 : vector<48x256xi32>
    %8 = vector.extract_strided_slice %3 {offsets = [0, 1], sizes = [48, 1], strides = [1, 1]} : vector<48x3xi32> to vector<48x1xi32>
    %9 = vector.broadcast %8 : vector<48x1xi32> to vector<48x256xi32>
    %10 = arith.cmpi eq, %4, %9 : vector<48x256xi32>
    %11 = arith.ori %7, %10 : vector<48x256xi1>
    %12 = vector.extract_strided_slice %3 {offsets = [0, 2], sizes = [48, 1], strides = [1, 1]} : vector<48x3xi32> to vector<48x1xi32>
    %13 = vector.broadcast %12 : vector<48x1xi32> to vector<48x256xi32>
    %14 = arith.cmpi eq, %4, %13 : vector<48x256xi32>
    %15 = arith.ori %11, %14 : vector<48x256xi1>
    %16 = arith.extui %15 : vector<48x256xi1> to vector<48x256xi32>
    %17 = arith.sitofp %16 : vector<48x256xi32> to vector<48x256xf32>
    %c0_5 = arith.constant 0 : index
    %c0_6 = arith.constant 0 : index
    %18 = vector.load %arg4[%c0_5, %c0_6] : memref<256x128xf32, #tpu.memory_space<vmem>>, vector<256x128xf32>
    %cst_7 = arith.constant dense<0.000000e+00> : vector<48x128xf32>
    %19 = tpu.matmul %17, %18, %cst_7 {dimension_numbers = #tpu.dot_dimension_numbers<[1], [0], [0], [1], [0, 0, 1, 1], [], []>} : vector<48x256xf32>, vector<256x128xf32>, vector<48x128xf32> -> vector<48x128xf32>
    %20 = arith.addf %2, %19 : vector<48x128xf32>
    %c0_8 = arith.constant 0 : index
    %c0_9 = arith.constant 0 : index
    %21 = vector.load %arg5[%c0_8, %c0_9] : memref<48x128xf32, #tpu.memory_space<vmem>>, vector<48x128xf32>
    tpu.vector_store %arg5[%c0_8, %c0_9], %20 {strides = array<i32>} : memref<48x128xf32, #tpu.memory_space<vmem>>, vector<48x128xf32>,
    return
  }
  func.func @transform_0(%arg0: i32) -> (i32, i32) {
    %c0_i32 = arith.constant 0 : i32
    %c0_i32_0 = arith.constant 0 : i32
    return %arg0, %c0_i32 : i32, i32
  }
  func.func @transform_1(%arg0: i32) -> (i32, i32) {
    %c0_i32 = arith.constant 0 : i32
    %c0_i32_0 = arith.constant 0 : i32
    return %arg0, %c0_i32 : i32, i32
  }
  func.func @transform_2(%arg0: i32) -> (i32, i32) {
    %c0_i32 = arith.constant 0 : i32
    %c0_i32_0 = arith.constant 0 : i32
    %c0_i32_1 = arith.constant 0 : i32
    return %c0_i32, %c0_i32_0 : i32, i32
  }
  func.func @transform_3(%arg0: i32) -> (i32, i32) {
    %c0_i32 = arith.constant 0 : i32
    %c0_i32_0 = arith.constant 0 : i32
    %c0_i32_1 = arith.constant 0 : i32
    return %c0_i32, %c0_i32_0 : i32, i32
  }
  func.func @transform_4(%arg0: i32) -> (i32, i32) {
    %c0_i32 = arith.constant 0 : i32
    %c0_i32_0 = arith.constant 0 : i32
    return %arg0, %c0_i32 : i32, i32
  }
}

</mosaic_0001>

<llo_original>
// kernel: tpu_custom_call.1
$region0: #{tpu_custom_call.1}
  #allocation0 [shape = 'u32[]', space=smem, size = 0x4, offset = 0x4, fixed_abs, tag = 'smem constant byte address 0x4 - core index']
  #allocation1 [shape = 'u32[144,128]{1,0:T(1,128)}', space=vmem, size = 0x12000, scoped, tag = 'internal scratch']
  %s0 = inlined_call_operand.vmem [shape: f32[48,12], index: 0, kind: input, shape index: {}]
  %s1 = inlined_call_operand.vmem [shape: s32[48,3], index: 1, kind: input, shape index: {}]
  %s2 = inlined_call_operand.vmem [shape: f32[12,128], index: 2, kind: input, shape index: {}]
  %s3 = inlined_call_operand.hbm [shape: f32[256,128], index: 3, kind: input, shape index: {}]
  %s4 = inlined_call_operand.hbm [shape: f32[48,128], index: 4, kind: output, shape index: {}]
  %s5 = sld [smem:[#allocation0]]
  $region30: #{tpu_custom_call.1} parent=0
    _
  %s7 = ssub.s32 1, %s5
  %s8 = scalar_select 0, %s7, %s5
  $region1: #{tpu_custom_call.1} parent=0
    #allocation2 [shape = 'u8[131072]{0}', space=vmem, size = 0x20000, scoped, tag = 'input window, operand 3, single buffered']
    #allocation3 [shape = 's32[1]{0}', space=sflag, size = 0x4, scoped, tag = 'scoped memory for tpu_custom_call.1']
    #allocation4 [shape = 's32[1]{0}', space=sflag, size = 0x4, scoped, tag = 'scoped memory for tpu_custom_call.1']
    #allocation5 [shape = 'u8[24576]{0}', space=vmem, size = 0x6000, scoped, tag = 'output window, operand 0, single buffered']
    %9 = vsyncpa [#allocation3], 0
    %10 = vsyncpa [#allocation4], 0
    // Predicated region
    $region2: #{tpu_custom_call.1} parent=1 // pred_check
      _
    $region3: #{tpu_custom_call.1} parent=1 // pred_check_branch
      %12 = sbr.rel (0) target = $region5
    $region4: #{tpu_custom_call.1} parent=1 // pred_region
      _
    $region5: #{tpu_custom_call.1} parent=1 // pred_fallthru
      _
    // Predicated region
    $region6: #{tpu_custom_call.1} parent=1 // pred_check
      _
    $region7: #{tpu_custom_call.1} parent=1 // pred_check_branch
      %14 = sbr.rel (0) target = $region9
    $region8: #{tpu_custom_call.1} parent=1 // pred_region
      _
    $region9: #{tpu_custom_call.1} parent=1 // pred_fallthru
      _
    // Predicated region
    $region10: #{tpu_custom_call.1} parent=1 // pred_check
      _
    $region11: #{tpu_custom_call.1} parent=1 // pred_check_branch
      %16 = sbr.rel (0) target = $region13
    $region12: #{tpu_custom_call.1} parent=1 // pred_region
      _
    $region13: #{tpu_custom_call.1} parent=1 // pred_fallthru
      _
    // Predicated region
    $region14: #{tpu_custom_call.1} parent=1 // pred_check
      _
    $region15: #{tpu_custom_call.1} parent=1 // pred_check_branch
      %18 = sbr.rel (0) target = $region17
    $region16: #{tpu_custom_call.1} parent=1 // pred_region
      %s20 = ssub.s32 4096, 4096
      %21 = vsyncadd [#allocation3], %s20
      %s22 = sshll.u32 [#allocation2], 4
      %s23 = int_to_ptr.vmem [resolvable:$true] %s22
      %28 = dma.hbm_to_vmem [thread:$0]  %s3, 4096, %s23, [#allocation3], 128, 128, 8
    $region17: #{tpu_custom_call.1} parent=1 // pred_fallthru
      _
    // Predicated region
    $region18: #{tpu_custom_call.1} parent=1 // pred_check
      _
    $region19: #{tpu_custom_call.1} parent=1 // pred_check_branch
      %30 = sbr.rel (0) target = $region21
    $region20: #{tpu_custom_call.1} parent=1 // pred_region
      %31 = dma.done [#allocation3], 4096
    $region21: #{tpu_custom_call.1} parent=1 // pred_fallthru
      _
    %v32 = vld [vmem:[%s0] sm:$0xff]
    %v33 = vld [vmem:[%s0 + $0x8] sm:$0xff]
    %v34 = vld [vmem:[%s0 + $0x10] sm:$0xff]
    %v35 = vld [vmem:[%s0 + $0x18] sm:$0xff]
    %v36 = vld [vmem:[%s0 + $0x20] sm:$0xff]
    %v37 = vld [vmem:[%s0 + $0x28] sm:$0xff]
    %v38 = vld [vmem:[%s2] sm:$0xff]
    %v39 = vld [vmem:[%s2 + $0x8] sm:$0xf]
    %v40 = vld [vmem:[%s1] sm:$0xff]
    %v41 = vld [vmem:[%s1 + $0x8] sm:$0xff]
    %v42 = vld [vmem:[%s1 + $0x10] sm:$0xff]
    %v43 = vld [vmem:[%s1 + $0x18] sm:$0xff]
    %v44 = vld [vmem:[%s1 + $0x20] sm:$0xff]
    %v45 = vld [vmem:[%s1 + $0x28] sm:$0xff]
    %v46 = vlaneseq
    %v47 = vand.u32 %v46, 127
    %v48 = vadd.s32 %v47, 128
    %49 = vset.pattern.permute.xlu0 0
    %50 = vperm.xlu0 %49, %v40
    %v51 = vpop.permute.xlu0 %50
    %52 = vset.pattern.permute.xlu0 0
    %53 = vperm.xlu0 %52, %v41
    %v54 = vpop.permute.xlu0 %53
    %55 = vset.pattern.permute.xlu0 0
    %56 = vperm.xlu0 %55, %v42
    %v57 = vpop.permute.xlu0 %56
    %58 = vset.pattern.permute.xlu0 0
    %59 = vperm.xlu0 %58, %v43
    %v60 = vpop.permute.xlu0 %59
    %61 = vset.pattern.permute.xlu0 0
    %62 = vperm.xlu0 %61, %v44
    %v63 = vpop.permute.xlu0 %62
    %64 = vset.pattern.permute.xlu0 0
    %65 = vperm.xlu0 %64, %v45
    %v66 = vpop.permute.xlu0 %65
    %vm67 = vcmp.eq.s32.totalorder %v47, %v51
    %vm68 = vcmp.eq.s32.totalorder %v48, %v51
    %vm69 = vcmp.eq.s32.totalorder %v47, %v54
    %vm70 = vcmp.eq.s32.totalorder %v48, %v54
    %vm71 = vcmp.eq.s32.totalorder %v47, %v57
    %vm72 = vcmp.eq.s32.totalorder %v48, %v57
    %vm73 = vcmp.eq.s32.totalorder %v47, %v60
    %vm74 = vcmp.eq.s32.totalorder %v48, %v60
    %vm75 = vcmp.eq.s32.totalorder %v47, %v63
    %vm76 = vcmp.eq.s32.totalorder %v48, %v63
    %vm77 = vcmp.eq.s32.totalorder %v47, %v66
    %vm78 = vcmp.eq.s32.totalorder %v48, %v66
    %79 = vset.pattern.permute.xlu0 1
    %80 = vperm.xlu0 %79, %v40
    %v81 = vpop.permute.xlu0 %80
    %82 = vset.pattern.permute.xlu0 1
    %83 = vperm.xlu0 %82, %v41
    %v84 = vpop.permute.xlu0 %83
    %85 = vset.pattern.permute.xlu0 1
    %86 = vperm.xlu0 %85, %v42
    %v87 = vpop.permute.xlu0 %86
    %88 = vset.pattern.permute.xlu0 1
    %89 = vperm.xlu0 %88, %v43
    %v90 = vpop.permute.xlu0 %89
    %91 = vset.pattern.permute.xlu0 1
    %92 = vperm.xlu0 %91, %v44
    %v93 = vpop.permute.xlu0 %92
    %94 = vset.pattern.permute.xlu0 1
    %95 = vperm.xlu0 %94, %v45
    %v96 = vpop.permute.xlu0 %95
    %vm97 = vcmp.eq.s32.totalorder %v47, %v81
    %vm98 = vcmp.eq.s32.totalorder %v48, %v81
    %vm99 = vcmp.eq.s32.totalorder %v47, %v84
    %vm100 = vcmp.eq.s32.totalorder %v48, %v84
    %vm101 = vcmp.eq.s32.totalorder %v47, %v87
    %vm102 = vcmp.eq.s32.totalorder %v48, %v87
    %vm103 = vcmp.eq.s32.totalorder %v47, %v90
    %vm104 = vcmp.eq.s32.totalorder %v48, %v90
    %vm105 = vcmp.eq.s32.totalorder %v47, %v93
    %vm106 = vcmp.eq.s32.totalorder %v48, %v93
    %vm107 = vcmp.eq.s32.totalorder %v47, %v96
    %vm108 = vcmp.eq.s32.totalorder %v48, %v96
    %vm109 = vmor %vm67, %vm97
    %vm110 = vmor %vm68, %vm98
    %vm111 = vmor %vm69, %vm99
    %vm112 = vmor %vm70, %vm100
    %vm113 = vmor %vm71, %vm101
    %vm114 = vmor %vm72, %vm102
    %vm115 = vmor %vm73, %vm103
    %vm116 = vmor %vm74, %vm104
    %vm117 = vmor %vm75, %vm105
    %vm118 = vmor %vm76, %vm106
    %vm119 = vmor %vm77, %vm107
    %vm120 = vmor %vm78, %vm108
    %121 = vset.pattern.permute.xlu0 2
    %122 = vperm.xlu0 %121, %v40
    %v123 = vpop.permute.xlu0 %122
    %124 = vset.pattern.permute.xlu0 2
    %125 = vperm.xlu0 %124, %v41
    %v126 = vpop.permute.xlu0 %125
    %127 = vset.pattern.permute.xlu0 2
    %128 = vperm.xlu0 %127, %v42
    %v129 = vpop.permute.xlu0 %128
    %130 = vset.pattern.permute.xlu0 2
    %131 = vperm.xlu0 %130, %v43
    %v132 = vpop.permute.xlu0 %131
    %133 = vset.pattern.permute.xlu0 2
    %134 = vperm.xlu0 %133, %v44
    %v135 = vpop.permute.xlu0 %134
    %136 = vset.pattern.permute.xlu0 2
    %137 = vperm.xlu0 %136, %v45
    %v138 = vpop.permute.xlu0 %137
    %vm139 = vcmp.eq.s32.totalorder %v47, %v123
    %vm140 = vcmp.eq.s32.totalorder %v48, %v123
    %vm141 = vcmp.eq.s32.totalorder %v47, %v126
    %vm142 = vcmp.eq.s32.totalorder %v48, %v126
    %vm143 = vcmp.eq.s32.totalorder %v47, %v129
    %vm144 = vcmp.eq.s32.totalorder %v48, %v129
    %vm145 = vcmp.eq.s32.totalorder %v47, %v132
    %vm146 = vcmp.eq.s32.totalorder %v48, %v132
    %vm147 = vcmp.eq.s32.totalorder %v47, %v135
    %vm148 = vcmp.eq.s32.totalorder %v48, %v135
    %vm149 = vcmp.eq.s32.totalorder %v47, %v138
    %vm150 = vcmp.eq.s32.totalorder %v48, %v138
    %vm151 = vmor %vm109, %vm139
    %vm152 = vmor %vm110, %vm140
    %vm153 = vmor %vm111, %vm141
    %vm154 = vmor %vm112, %vm142
    %vm155 = vmor %vm113, %vm143
    %vm156 = vmor %vm114, %vm144
    %vm157 = vmor %vm115, %vm145
    %vm158 = vmor %vm116, %vm146
    %vm159 = vmor %vm117, %vm147
    %vm160 = vmor %vm118, %vm148
    %vm161 = vmor %vm119, %vm149
    %vm162 = vmor %vm120, %vm150
    %v163 = vsel %vm151, 1, 0
    %v164 = vsel %vm152, 1, 0
    %v165 = vsel %vm153, 1, 0
    %v166 = vsel %vm154, 1, 0
    %v167 = vsel %vm155, 1, 0
    %v168 = vsel %vm156, 1, 0
    %v169 = vsel %vm157, 1, 0
    %v170 = vsel %vm158, 1, 0
    %v171 = vsel %vm159, 1, 0
    %v172 = vsel %vm160, 1, 0
    %v173 = vsel %vm161, 1, 0
    %v174 = vsel %vm162, 1, 0
    %v175 = vcvt.s32.f32 %v163
    %v176 = vcvt.s32.f32 %v164
    %v177 = vcvt.s32.f32 %v165
    %v178 = vcvt.s32.f32 %v166
    %v179 = vcvt.s32.f32 %v167
    %v180 = vcvt.s32.f32 %v168
    %v181 = vcvt.s32.f32 %v169
    %v182 = vcvt.s32.f32 %v170
    %v183 = vcvt.s32.f32 %v171
    %v184 = vcvt.s32.f32 %v172
    %v185 = vcvt.s32.f32 %v173
    %v186 = vcvt.s32.f32 %v174
    %v187 = vld [vmem:[#allocation2] sm:$0xff]
    %v188 = vld [vmem:[#allocation2 + $0x8] sm:$0xff]
    %v189 = vld [vmem:[#allocation2 + $0x10] sm:$0xff]
    %v190 = vld [vmem:[#allocation2 + $0x18] sm:$0xff]
    %v191 = vld [vmem:[#allocation2 + $0x20] sm:$0xff]
    %v192 = vld [vmem:[#allocation2 + $0x28] sm:$0xff]
    %v193 = vld [vmem:[#allocation2 + $0x30] sm:$0xff]
    %v194 = vld [vmem:[#allocation2 + $0x38] sm:$0xff]
    %v195 = vld [vmem:[#allocation2 + $0x40] sm:$0xff]
    %v196 = vld [vmem:[#allocation2 + $0x48] sm:$0xff]
    %v197 = vld [vmem:[#allocation2 + $0x50] sm:$0xff]
    %v198 = vld [vmem:[#allocation2 + $0x58] sm:$0xff]
    %v199 = vld [vmem:[#allocation2 + $0x60] sm:$0xff]
    %v200 = vld [vmem:[#allocation2 + $0x68] sm:$0xff]
    %v201 = vld [vmem:[#allocation2 + $0x70] sm:$0xff]
    %v202 = vld [vmem:[#allocation2 + $0x78] sm:$0xff]
    %v203 = vld [vmem:[#allocation2 + $0x80] sm:$0xff]
    %v204 = vld [vmem:[#allocation2 + $0x88] sm:$0xff]
    %v205 = vld [vmem:[#allocation2 + $0x90] sm:$0xff]
    %v206 = vld [vmem:[#allocation2 + $0x98] sm:$0xff]
    %v207 = vld [vmem:[#allocation2 + $0xa0] sm:$0xff]
    %v208 = vld [vmem:[#allocation2 + $0xa8] sm:$0xff]
    %v209 = vld [vmem:[#allocation2 + $0xb0] sm:$0xff]
    %v210 = vld [vmem:[#allocation2 + $0xb8] sm:$0xff]
    %v211 = vld [vmem:[#allocation2 + $0xc0] sm:$0xff]
    %v212 = vld [vmem:[#allocation2 + $0xc8] sm:$0xff]
    %v213 = vld [vmem:[#allocation2 + $0xd0] sm:$0xff]
    %v214 = vld [vmem:[#allocation2 + $0xd8] sm:$0xff]
    %v215 = vld [vmem:[#allocation2 + $0xe0] sm:$0xff]
    %v216 = vld [vmem:[#allocation2 + $0xe8] sm:$0xff]
    %v217 = vld [vmem:[#allocation2 + $0xf0] sm:$0xff]
    %v218 = vld [vmem:[#allocation2 + $0xf8] sm:$0xff]
    %219 = vmatprep.subr.mxu0 0.0
    %220 = vmatpush1.msra.mxu0 %v187
    %221 = vmatprep.subr.mxu0 0.0
    %222 = vmatpush1.msra.mxu0 %v188
    %223 = vmatprep.subr.mxu0 0.0
    %224 = vmatpush1.msra.mxu0 %v189
    %225 = vmatprep.subr.mxu0 0.0
    %226 = vmatpush1.msra.mxu0 %v190
    %227 = vmatprep.subr.mxu0 0.0
    %228 = vmatpush1.msra.mxu0 %v191
    %229 = vmatprep.subr.mxu0 0.0
    %230 = vmatpush1.msra.mxu0 %v192
    %231 = vmatprep.subr.mxu0 0.0
    %232 = vmatpush1.msra.mxu0 %v193
    %233 = vmatprep.subr.mxu0 0.0
    %234 = vmatpush1.msra.mxu0 %v194
    %235 = vmatprep.subr.mxu0 0.0
    %236 = vmatpush1.msra.mxu0 %v195
    %237 = vmatprep.subr.mxu0 0.0
    %238 = vmatpush1.msra.mxu0 %v196
    %239 = vmatprep.subr.mxu0 0.0
    %240 = vmatpush1.msra.mxu0 %v197
    %241 = vmatprep.subr.mxu0 0.0
    %242 = vmatpush1.msra.mxu0 %v198
    %243 = vmatprep.subr.mxu0 0.0
    %244 = vmatpush1.msra.mxu0 %v199
    %245 = vmatprep.subr.mxu0 0.0
    %246 = vmatpush1.msra.mxu0 %v200
    %247 = vmatprep.subr.mxu0 0.0
    %248 = vmatpush1.msra.mxu0 %v201
    %249 = vmatprep.subr.mxu0 0.0
    %250 = vmatpush1.msra.mxu0 %v202
    %251 = vmatprep.subr.mxu0 0.0
    %252 = vmatpush1.msra.mxu0 %v203
    %253 = vmatprep.subr.mxu0 0.0
    %254 = vmatpush1.msra.mxu0 %v204
    %255 = vmatprep.subr.mxu0 0.0
    %256 = vmatpush1.msra.mxu0 %v205
    %257 = vmatprep.subr.mxu0 0.0
    %258 = vmatpush1.msra.mxu0 %v206
    %259 = vmatprep.subr.mxu0 0.0
    %260 = vmatpush1.msra.mxu0 %v207
    %261 = vmatprep.subr.mxu0 0.0
    %262 = vmatpush1.msra.mxu0 %v208
    %263 = vmatprep.subr.mxu0 0.0
    %264 = vmatpush1.msra.mxu0 %v209
    %265 = vmatprep.subr.mxu0 0.0
    %266 = vmatpush1.msra.mxu0 %v210
    %267 = vmatprep.subr.mxu0 0.0
    %268 = vmatpush1.msra.mxu0 %v211
    %269 = vmatprep.subr.mxu0 0.0
    %270 = vmatpush1.msra.mxu0 %v212
    %271 = vmatprep.subr.mxu0 0.0
    %272 = vmatpush1.msra.mxu0 %v213
    %273 = vmatprep.subr.mxu0 0.0
    %274 = vmatpush1.msra.mxu0 %v214
    %275 = vmatprep.subr.mxu0 0.0
    %276 = vmatpush1.msra.mxu0 %v215
    %277 = vmatprep.subr.mxu0 0.0
    %278 = vmatpush1.msra.mxu0 %v216
    %279 = vmatprep.subr.mxu0 0.0
    %280 = vmatpush1.msra.mxu0 %v217
    %281 = vmatprep.subr.mxu0 0.0
    %282 = vmatpush1.msra.mxu0 %v218
    %283 = vmatprep.mubr.f32.mxu0 %v176
    %284 = vmatmul.mubr.f32.gmra.mrb[0].mxu0 %v175
    %v285 = vpop.f32.mrb[0].mxu0
    %v286 = vadd.f32 0.0, %v285
    %v287 = vpop.f32.mrb[0].mxu0
    %288 = vmatprep.mubr.f32.mxu0 %v178
    %289 = vmatmul.mubr.f32.gmra.mrb[0].mxu0 %v177
    %v290 = vpop.f32.mrb[0].mxu0
    %v291 = vadd.f32 0.0, %v290
    %v292 = vpop.f32.mrb[0].mxu0
    %293 = vmatprep.mubr.f32.mxu0 %v180
    %294 = vmatmul.mubr.f32.gmra.mrb[0].mxu0 %v179
    %v295 = vpop.f32.mrb[0].mxu0
    %v296 = vadd.f32 0.0, %v295
    %v297 = vpop.f32.mrb[0].mxu0
    %298 = vmatprep.mubr.f32.mxu0 %v182
    %299 = vmatmul.mubr.f32.gmra.mrb[0].mxu0 %v181
    %v300 = vpop.f32.mrb[0].mxu0
    %v301 = vadd.f32 0.0, %v300
    %v302 = vpop.f32.mrb[0].mxu0
    %303 = vmatprep.mubr.f32.mxu0 %v184
    %304 = vmatmul.mubr.f32.gmra.mrb[0].mxu0 %v183
    %v305 = vpop.f32.mrb[0].mxu0
    %v306 = vadd.f32 0.0, %v305
    %v307 = vpop.f32.mrb[0].mxu0
    %308 = vmatprep.mubr.f32.mxu0 %v186
    %309 = vmatmul.mubr.f32.gmra.mrb[0].mxu0 %v185
    %v310 = vpop.f32.mrb[0].mxu0
    %v311 = vadd.f32 0.0, %v310
    %v312 = vpop.f32.mrb[0].mxu0
    %313 = vdwg.mxu0
    %vm314 = vcmask 97280
    %v316 = vsel %vm314, %v32, 0
    %v319 = vsel %vm314, %v33, 0
    %v322 = vsel %vm314, %v34, 0
    %v325 = vsel %vm314, %v35, 0
    %v328 = vsel %vm314, %v36, 0
    %v331 = vsel %vm314, %v37, 0
    %vm333 = vcmask 1043456
    %v335 = vsel %vm333, %v39, 0
    %337 = vmatprep.subr.mxu0 0.0
    %338 = vmatpush1.msra.mxu0 %v38
    %339 = vmatprep.subr.mxu0 0.0
    %340 = vmatpush1.msra.mxu0 %v335
    %341 = vmatprep.subr.mxu0 0.0
    %342 = vmatpush1.msra.mxu0 0.0
    %343 = vmatprep.subr.mxu0 0.0
    %344 = vmatpush1.msra.mxu0 0.0
    %345 = vmatprep.subr.mxu0 0.0
    %346 = vmatpush1.msra.mxu0 0.0
    %347 = vmatprep.subr.mxu0 0.0
    %348 = vmatpush1.msra.mxu0 0.0
    %349 = vmatprep.subr.mxu0 0.0
    %350 = vmatpush1.msra.mxu0 0.0
    %351 = vmatprep.subr.mxu0 0.0
    %352 = vmatpush1.msra.mxu0 0.0
    %353 = vmatprep.subr.mxu0 0.0
    %354 = vmatpush1.msra.mxu0 0.0
    %355 = vmatprep.subr.mxu0 0.0
    %356 = vmatpush1.msra.mxu0 0.0
    %357 = vmatprep.subr.mxu0 0.0
    %358 = vmatpush1.msra.mxu0 0.0
    %359 = vmatprep.subr.mxu0 0.0
    %360 = vmatpush1.msra.mxu0 0.0
    %361 = vmatprep.subr.mxu0 0.0
    %362 = vmatpush1.msra.mxu0 0.0
    %363 = vmatprep.subr.mxu0 0.0
    %364 = vmatpush1.msra.mxu0 0.0
    %365 = vmatprep.subr.mxu0 0.0
    %366 = vmatpush1.msra.mxu0 0.0
    %367 = vmatprep.subr.mxu0 0.0
    %368 = vmatpush1.msra.mxu0 0.0
    %369 = vmatprep.subr.mxu0 0.0
    %370 = vmatpush1.msra.mxu0 0.0
    %371 = vmatprep.subr.mxu0 0.0
    %372 = vmatpush1.msra.mxu0 0.0
    %373 = vmatprep.subr.mxu0 0.0
    %374 = vmatpush1.msra.mxu0 0.0
    %375 = vmatprep.subr.mxu0 0.0
    %376 = vmatpush1.msra.mxu0 0.0
    %377 = vmatprep.subr.mxu0 0.0
    %378 = vmatpush1.msra.mxu0 0.0
    %379 = vmatprep.subr.mxu0 0.0
    %380 = vmatpush1.msra.mxu0 0.0
    %381 = vmatprep.subr.mxu0 0.0
    %382 = vmatpush1.msra.mxu0 0.0
    %383 = vmatprep.subr.mxu0 0.0
    %384 = vmatpush1.msra.mxu0 0.0
    %385 = vmatprep.subr.mxu0 0.0
    %386 = vmatpush1.msra.mxu0 0.0
    %387 = vmatprep.subr.mxu0 0.0
    %388 = vmatpush1.msra.mxu0 0.0
    %389 = vmatprep.subr.mxu0 0.0
    %390 = vmatpush1.msra.mxu0 0.0
    %391 = vmatprep.subr.mxu0 0.0
    %392 = vmatpush1.msra.mxu0 0.0
    %393 = vmatprep.subr.mxu0 0.0
    %394 = vmatpush1.msra.mxu0 0.0
    %395 = vmatprep.subr.mxu0 0.0
    %396 = vmatpush1.msra.mxu0 0.0
    %397 = vmatprep.subr.mxu0 0.0
    %398 = vmatpush1.msra.mxu0 0.0
    %399 = vmatprep.subr.mxu0 0.0
    %400 = vmatpush1.msra.mxu0 0.0
    %401 = vmatprep.mubr.f32.mxu0 0.0
    %402 = vmatmul.mubr.f32.gmra.mrb[0].mxu0 %v316
    %v403 = vpop.f32.mrb[0].mxu0
    %v404 = vadd.f32 %v286, %v403
    %v405 = vpop.f32.mrb[0].mxu0
    %406 = vmatprep.mubr.f32.mxu0 0.0
    %407 = vmatmul.mubr.f32.gmra.mrb[0].mxu0 %v319
    %v408 = vpop.f32.mrb[0].mxu0
    %v409 = vadd.f32 %v291, %v408
    %v410 = vpop.f32.mrb[0].mxu0
    %411 = vmatprep.mubr.f32.mxu0 0.0
    %412 = vmatmul.mubr.f32.gmra.mrb[0].mxu0 %v322
    %v413 = vpop.f32.mrb[0].mxu0
    %v414 = vadd.f32 %v296, %v413
    %v415 = vpop.f32.mrb[0].mxu0
    %416 = vmatprep.mubr.f32.mxu0 0.0
    %417 = vmatmul.mubr.f32.gmra.mrb[0].mxu0 %v325
    %v418 = vpop.f32.mrb[0].mxu0
    %v419 = vadd.f32 %v301, %v418
    %v420 = vpop.f32.mrb[0].mxu0
    %421 = vmatprep.mubr.f32.mxu0 0.0
    %422 = vmatmul.mubr.f32.gmra.mrb[0].mxu0 %v328
    %v423 = vpop.f32.mrb[0].mxu0
    %v424 = vadd.f32 %v306, %v423
    %v425 = vpop.f32.mrb[0].mxu0
    %426 = vmatprep.mubr.f32.mxu0 0.0
    %427 = vmatmul.mubr.f32.gmra.mrb[0].mxu0 %v331
    %v428 = vpop.f32.mrb[0].mxu0
    %v429 = vadd.f32 %v311, %v428
    %v430 = vpop.f32.mrb[0].mxu0
    %431 = vdwg.mxu0
    %432 = vst [vmem:[#allocation5] sm:$0xff] %v404
    %433 = vst [vmem:[#allocation5 + $0x8] sm:$0xff] %v409
    %434 = vst [vmem:[#allocation5 + $0x10] sm:$0xff] %v414
    %435 = vst [vmem:[#allocation5 + $0x18] sm:$0xff] %v419
    %436 = vst [vmem:[#allocation5 + $0x20] sm:$0xff] %v424
    %437 = vst [vmem:[#allocation5 + $0x28] sm:$0xff] %v429
    // Predicated region
    $region22: #{tpu_custom_call.1} parent=1 // pred_check
      _
    $region23: #{tpu_custom_call.1} parent=1 // pred_check_branch
      %439 = sbr.rel (0) target = $region25
    $region24: #{tpu_custom_call.1} parent=1 // pred_region
      %s441 = ssub.s32 768, 768
      %442 = vsyncadd [#allocation4], %s441
      %s443 = sshll.u32 [#allocation5], 4
      %s444 = int_to_ptr.vmem [resolvable:$true] %s443
      %449 = dma.vmem_to_hbm [thread:$0]  %s444, 768, %s4, [#allocation4], 128, 128, 8
    $region25: #{tpu_custom_call.1} parent=1 // pred_fallthru
      _
    // Predicated region
    $region26: #{tpu_custom_call.1} parent=1 // pred_check
      _
    $region27: #{tpu_custom_call.1} parent=1 // pred_check_branch
      %451 = sbr.rel (0) target = $region29
    $region28: #{tpu_custom_call.1} parent=1 // pred_region
      %452 = dma.done [#allocation4], 768
    $region29: #{tpu_custom_call.1} parent=1 // pred_fallthru
      _
    %453 = vsyncpa [#allocation3], 1
    %454 = vsyncpa [#allocation4], 1

</llo_original>
